<compile_context>
chip_gen: v5e
topology: v5e:2x2
jax: 0.10.0
libtpu: 0.0.40
codegen_flags: <defaults>
</compile_context>

<pallas_src>
import jax
import jax.numpy as jnp
from jax import lax
from jax.experimental import pallas as pl
from jax.experimental.pallas import tpu as pltpu


def _leaky_relu(x, slope=0.2):
    # LeakyReLU(0.2); max(x, slope*x) == where(x > 0, x, slope*x) for slope in (0, 1).
    return jnp.maximum(x, slope * x)


def sts_dan_kernel(a_tok_ref, b_tok_ref, table_ref,
                   w1_ref, w2_ref, w3_ref, wv_ref, wfc_ref, bias_ref,
                   out_ref):
    TB, S = a_tok_ref.shape
    V = table_ref.shape[1]
    E = w1_ref.shape[0]
    H = w1_ref.shape[1]
    bf16 = jnp.bfloat16

    # Packed biases: static sub-vreg slices of one (5, W) array.
    b1 = bias_ref[0:1, :H]
    b2 = bias_ref[1:2, :H]
    b3 = bias_ref[2:3, :E]
    bv = bias_ref[3:4, :E]
    bfc = bias_ref[4:5, :2]

    # Stack both sentences along the sublane axis ONCE (tiny int32 concat),
    # so every following stage runs one pass over 2*TB rows.
    tok = jnp.concatenate([a_tok_ref[...], b_tok_ref[...]], axis=0)     # (2TB, S)

    # Non-pad length (generate_attention_mask -> torch.sum(~mask, -1)).
    length = jnp.sum((tok >= 1).astype(jnp.float32), axis=-1,
                     keepdims=True)                                      # (2TB, 1)

    # counts[r, v] = #{s : tok[r, s] == v}; S is tiny & static -> unrolled
    # VPU compare/add loop over a single (2TB, V) operand.
    vocab_iota = lax.broadcasted_iota(jnp.int32, (2 * TB, V), 1)
    cnt = jnp.zeros((2 * TB, V), jnp.float32)
    for s in range(S):
        cnt = cnt + (tok[:, s:s + 1] == vocab_iota).astype(jnp.float32)

    # Fused embedding gather + sum over the sequence:
    #   sum_s table[tok[r, s]] == counts[r] @ table.
    # counts are integers <= S -> exact in bf16; the table is a bf16 hi/lo
    # split, so two single-pass bf16 dots give near-f32 precision.
    cnt_bf = cnt.astype(bf16)
    summed = jnp.dot(cnt_bf, table_ref[0], preferred_element_type=jnp.float32)
    summed = summed + jnp.dot(cnt_bf, table_ref[1],
                              preferred_element_type=jnp.float32)        # (2TB, E)

    # AvgPool1d over S, then scale by the number of non-pad tokens.
    pooled = summed * (length * (1.0 / S))                               # (2TB, E)

    def dot(x, w_ref):
        return jnp.dot(x.astype(bf16), w_ref[...],
                       preferred_element_type=jnp.float32)

    # DAN encoder: fc1 -> LReLU -> fc2 -> LReLU -> fc3, both sentences at once.
    h1 = _leaky_relu(dot(pooled, w1_ref) + b1)
    h2 = _leaky_relu(dot(h1, w2_ref) + b2)
    enc = dot(h2, w3_ref) + b3                                           # (2TB, E)

    u = enc[:TB]                                                         # (TB, E)
    v = enc[TB:]                                                         # (TB, E)
    # TODO(synk): nn.Dropout on u/v is identity (eval-mode semantics).
    v = _leaky_relu(dot(v, wv_ref) + bv)                                 # (TB, E)

    # Head: one lane-axis concat (3 XLU shifts) + ONE K=4E matmul, single cast.
    feat = jnp.concatenate([u, v, jnp.abs(u - v), u * v], axis=-1)       # (TB, 4E)
    out_ref[...] = (jnp.dot(feat.astype(bf16), wfc_ref[...],
                            preferred_element_type=jnp.float32) + bfc)   # (TB, 2)


def prepare_params(params):
    """One-time param prep: bf16 matmul operands, hi/lo table, packed biases."""
    bf16, f32 = jnp.bfloat16, jnp.float32
    table = params["embedding"].astype(f32)                  # (V, E)
    t_hi = table.astype(bf16)
    t_lo = (table - t_hi.astype(f32)).astype(bf16)            # residual -> near-f32

    H = params["w1"].shape[1]
    E = params["w3"].shape[1]
    W = max(H, E, 2)
    biases = jnp.zeros((5, W), f32)
    biases = biases.at[0, :H].set(params["b1"][0])
    biases = biases.at[1, :H].set(params["b2"][0])
    biases = biases.at[2, :E].set(params["b3"][0])
    biases = biases.at[3, :E].set(params["bv"][0])
    biases = biases.at[4, :2].set(params["bfc"][0])

    return {
        "table": jnp.stack([t_hi, t_lo], axis=0),             # (2, V, E) bf16
        "w1": params["w1"].astype(bf16),                      # (E, H)
        "w2": params["w2"].astype(bf16),                      # (H, H)
        "w3": params["w3"].astype(bf16),                      # (H, E)
        "wv": params["wv"].astype(bf16),                      # (E, E)
        "wfc": params["wfc"].astype(bf16),                    # (4E, 2)
        "biases": biases,                                     # (5, W) f32
    }


def sts_model_forward(a_tokens, b_tokens, prepped, *, pair_block=128):
    """Equivalent of STSModel('dan', ...).forward(a, b) in eval mode."""
    B, S = a_tokens.shape
    table = prepped["table"]
    _, V, E = table.shape
    H = prepped["w1"].shape[1]
    W = prepped["biases"].shape[1]

    # Grid over sentence pairs: TB pairs (2*TB encoder rows) per step so the
    # MXU M dimension is filled at realistic batch sizes; weights/table are
    # VMEM-resident (same block index every step -> fetched once).
    TB = min(B, pair_block)
    if B % TB != 0:
        TB = B          # awkward batch sizes: single step, full-dim block
    grid = (B // TB,)

    def resident(*shape):
        return pl.BlockSpec(shape, lambda i: (0,) * len(shape))

    # NOTE: the whole working set is tiny here.  For large vocabularies on
    # v7x (64 MiB VMEM) the (V, E) table should instead stay in HBM
    # (memory_space=pl.ANY) with DMA-gathered pages, or be tiled with an
    # accumulating vocab grid axis.
    logits = pl.pallas_call(
        sts_dan_kernel,
        out_shape=jax.ShapeDtypeStruct((B, 2), jnp.float32),
        grid=grid,
        in_specs=[
            pl.BlockSpec((TB, S), lambda i: (i, 0)),          # a tokens
            pl.BlockSpec((TB, S), lambda i: (i, 0)),          # b tokens
            resident(2, V, E),                                # bf16 hi/lo table
            resident(E, H), resident(H, H), resident(H, E),   # w1, w2, w3
            resident(E, E),                                    # wv
            resident(4 * E, 2),                                # wfc (un-split)
            resident(5, W),                                    # packed biases
        ],
        # (TB, 2) store is lane-masked; acceptable while the head is 2-wide.
        out_specs=pl.BlockSpec((TB, 2), lambda i: (i, 0)),
        compiler_params=pltpu.CompilerParams(
            dimension_semantics=("parallel",)),                # v7x: both TCs
    )(a_tokens.astype(jnp.int32), b_tokens.astype(jnp.int32),
      table, prepped["w1"], prepped["w2"], prepped["w3"],
      prepped["wv"], prepped["wfc"], prepped["biases"])
    # STSModel.forward returns (logits, attn_a, attn_b); attention unused here.
    return logits, None, None


# --------------------------- parameter init (deterministic) ---------------------------

def _xavier_uniform(key, out_features, in_features):
    limit = (6.0 / (in_features + out_features)) ** 0.5
    # Generated in PyTorch's (out, in) convention, returned transposed as (in, out).
    w = jax.random.uniform(key, (out_features, in_features), jnp.float32, -limit, limit)
    return w.T


def _bias(key, out_features, in_features):
    bound = 1.0 / (in_features ** 0.5)
    return jax.random.uniform(key, (1, out_features), jnp.float32, -bound, bound)


def init_params(key, num_embeddings, embedding_dim, hidden_size):
    E, H = embedding_dim, hidden_size
    keys = jax.random.split(key, 12)
    lim = (6.0 / (num_embeddings + E)) ** 0.5
    params = {
        # Embedding: xavier_uniform over (V, E); padding row re-initialized just
        # like the PyTorch reference (forward still reads row 0).
        "embedding": jax.random.uniform(keys[0], (num_embeddings, E),
                                        jnp.float32, -lim, lim),
        # DAN encoder: fc1 (E->H), fc2 (H->H), fc3 (H->E)
        "w1": _xavier_uniform(keys[1], H, E), "b1": _bias(keys[2], H, E),
        "w2": _xavier_uniform(keys[3], H, H), "b2": _bias(keys[4], H, H),
        "w3": _xavier_uniform(keys[5], E, H), "b3": _bias(keys[6], E, H),
        # STS head: v_linear (E->E), fc (4E->2)
        "wv": _xavier_uniform(keys[7], E, E), "bv": _bias(keys[8], E, E),
        "wfc": _xavier_uniform(keys[9], 2, 4 * E), "bfc": _bias(keys[10], 2, 4 * E),
    }
    return params


if __name__ == "__main__":
    # config analogue: num_embeddings=50, embedding_dim=32, hidden_size=32,
    #                  use_attention=False, dropout=0.1 (eval -> identity)
    V, E, H = 50, 32, 32
    B, S = 2, 8

    key = jax.random.PRNGKey(0)
    k_params, k_a, k_b = jax.random.split(key, 3)
    params = init_params(k_params, V, E, H)
    prepped = prepare_params(params)

    # Token-id inputs (0 is the pad token).
    a_tokens = jax.random.randint(k_a, (B, S), 0, V, dtype=jnp.int32)
    b_tokens = jax.random.randint(k_b, (B, S), 0, V, dtype=jnp.int32)
    # Force some padding positions.
    a_tokens = a_tokens.at[:, -2:].set(0)
    b_tokens = b_tokens.at[:, -3:].set(0)

    logits, attn_a, attn_b = sts_model_forward(a_tokens, b_tokens, prepped)
    logits = jax.block_until_ready(logits)
    assert logits.shape == (B, 2) and logits.dtype == jnp.float32
    print("KERNEL_OK")
</pallas_src>

<mosaic_0001>
module attributes {stable_mosaic.version = 11 : i64} {
  func.func @sts_dan_kernel(%arg0: i32, %arg1: memref<2x8xi32, #tpu.memory_space<vmem>>, %arg2: memref<2x8xi32, #tpu.memory_space<vmem>>, %arg3: memref<2x50x32xbf16, #tpu.memory_space<vmem>>, %arg4: memref<32x32xbf16, #tpu.memory_space<vmem>>, %arg5: memref<32x32xbf16, #tpu.memory_space<vmem>>, %arg6: memref<32x32xbf16, #tpu.memory_space<vmem>>, %arg7: memref<32x32xbf16, #tpu.memory_space<vmem>>, %arg8: memref<128x2xbf16, #tpu.memory_space<vmem>>, %arg9: memref<5x32xf32, #tpu.memory_space<vmem>>, %arg10: memref<2x2xf32, #tpu.memory_space<vmem>>) attributes {dimension_semantics = [#tpu.dimension_semantics<parallel>], iteration_bounds = array<i64: 1>, scalar_prefetch = 0 : i64, scratch_operands = 0 : i64, tpu.core_type = #tpu.core_type<tc>, window_params = [{transform_indices = @transform_0, window_bounds = array<i64: 2, 8>}, {transform_indices = @transform_1, window_bounds = array<i64: 2, 8>}, {pipeline_mode = #tpu.pipeline_mode<synchronous>, transform_indices = @transform_2, window_bounds = array<i64: 2, 50, 32>}, {pipeline_mode = #tpu.pipeline_mode<synchronous>, transform_indices = @transform_3, window_bounds = array<i64: 32, 32>}, {pipeline_mode = #tpu.pipeline_mode<synchronous>, transform_indices = @transform_4, window_bounds = array<i64: 32, 32>}, {pipeline_mode = #tpu.pipeline_mode<synchronous>, transform_indices = @transform_5, window_bounds = array<i64: 32, 32>}, {pipeline_mode = #tpu.pipeline_mode<synchronous>, transform_indices = @transform_6, window_bounds = array<i64: 32, 32>}, {pipeline_mode = #tpu.pipeline_mode<synchronous>, transform_indices = @transform_7, window_bounds = array<i64: 128, 2>}, {pipeline_mode = #tpu.pipeline_mode<synchronous>, transform_indices = @transform_8, window_bounds = array<i64: 5, 32>}, {transform_indices = @transform_9, window_bounds = array<i64: 2, 2>}]} {
    %c0 = arith.constant 0 : index
    %c0_0 = arith.constant 0 : index
    %0 = vector.load %arg9[%c0, %c0_0] : memref<5x32xf32, #tpu.memory_space<vmem>>, vector<1x32xf32>
    %c1 = arith.constant 1 : index
    %c0_1 = arith.constant 0 : index
    %1 = vector.load %arg9[%c1, %c0_1] : memref<5x32xf32, #tpu.memory_space<vmem>>, vector<1x32xf32>
    %c2 = arith.constant 2 : index
    %c0_2 = arith.constant 0 : index
    %2 = vector.load %arg9[%c2, %c0_2] : memref<5x32xf32, #tpu.memory_space<vmem>>, vector<1x32xf32>
    %c3 = arith.constant 3 : index
    %c0_3 = arith.constant 0 : index
    %3 = vector.load %arg9[%c3, %c0_3] : memref<5x32xf32, #tpu.memory_space<vmem>>, vector<1x32xf32>
    %c4 = arith.constant 4 : index
    %c0_4 = arith.constant 0 : index
    %4 = vector.load %arg9[%c4, %c0_4] : memref<5x32xf32, #tpu.memory_space<vmem>>, vector<1x2xf32>
    %c0_5 = arith.constant 0 : index
    %c0_6 = arith.constant 0 : index
    %5 = vector.load %arg1[%c0_5, %c0_6] : memref<2x8xi32, #tpu.memory_space<vmem>>, vector<2x8xi32>
    %c0_7 = arith.constant 0 : index
    %c0_8 = arith.constant 0 : index
    %6 = vector.load %arg2[%c0_7, %c0_8] : memref<2x8xi32, #tpu.memory_space<vmem>>, vector<2x8xi32>
    %7 = tpu.concatenate %5, %6 in 0 : vector<2x8xi32>, vector<2x8xi32> -> vector<4x8xi32>
    %c1_i32 = arith.constant 1 : i32
    %8 = vector.broadcast %c1_i32 : i32 to vector<4x8xi32>
    %9 = arith.cmpi sge, %7, %8 : vector<4x8xi32>
    %10 = arith.extui %9 : vector<4x8xi1> to vector<4x8xi32>
    %11 = arith.sitofp %10 : vector<4x8xi32> to vector<4x8xf32>
    %cst = arith.constant dense<0.000000e+00> : vector<4xf32>
    %12 = vector.multi_reduction <add>, %11, %cst [1] : vector<4x8xf32> to vector<4xf32>
    %13 = vector.shape_cast %12 : vector<4xf32> to vector<4x1xf32>
    %14 = tpu.iota {dimensions = array<i32: 1>} : vector<4x50xi32>
    %cst_9 = arith.constant 0.000000e+00 : f32
    %15 = vector.broadcast %cst_9 : f32 to vector<4x50xf32>
    %16 = vector.extract_strided_slice %7 {offsets = [0, 0], sizes = [4, 1], strides = [1, 1]} : vector<4x8xi32> to vector<4x1xi32>
    %17 = vector.broadcast %16 : vector<4x1xi32> to vector<4x50xi32>
    %18 = arith.cmpi eq, %17, %14 : vector<4x50xi32>
    %19 = arith.extui %18 : vector<4x50xi1> to vector<4x50xi32>
    %20 = arith.sitofp %19 : vector<4x50xi32> to vector<4x50xf32>
    %21 = arith.addf %15, %20 : vector<4x50xf32>
    %22 = vector.extract_strided_slice %7 {offsets = [0, 1], sizes = [4, 1], strides = [1, 1]} : vector<4x8xi32> to vector<4x1xi32>
    %23 = vector.broadcast %22 : vector<4x1xi32> to vector<4x50xi32>
    %24 = arith.cmpi eq, %23, %14 : vector<4x50xi32>
    %25 = arith.extui %24 : vector<4x50xi1> to vector<4x50xi32>
    %26 = arith.sitofp %25 : vector<4x50xi32> to vector<4x50xf32>
    %27 = arith.addf %21, %26 : vector<4x50xf32>
    %28 = vector.extract_strided_slice %7 {offsets = [0, 2], sizes = [4, 1], strides = [1, 1]} : vector<4x8xi32> to vector<4x1xi32>
    %29 = vector.broadcast %28 : vector<4x1xi32> to vector<4x50xi32>
    %30 = arith.cmpi eq, %29, %14 : vector<4x50xi32>
    %31 = arith.extui %30 : vector<4x50xi1> to vector<4x50xi32>
    %32 = arith.sitofp %31 : vector<4x50xi32> to vector<4x50xf32>
    %33 = arith.addf %27, %32 : vector<4x50xf32>
    %34 = vector.extract_strided_slice %7 {offsets = [0, 3], sizes = [4, 1], strides = [1, 1]} : vector<4x8xi32> to vector<4x1xi32>
    %35 = vector.broadcast %34 : vector<4x1xi32> to vector<4x50xi32>
    %36 = arith.cmpi eq, %35, %14 : vector<4x50xi32>
    %37 = arith.extui %36 : vector<4x50xi1> to vector<4x50xi32>
    %38 = arith.sitofp %37 : vector<4x50xi32> to vector<4x50xf32>
    %39 = arith.addf %33, %38 : vector<4x50xf32>
    %40 = vector.extract_strided_slice %7 {offsets = [0, 4], sizes = [4, 1], strides = [1, 1]} : vector<4x8xi32> to vector<4x1xi32>
    %41 = vector.broadcast %40 : vector<4x1xi32> to vector<4x50xi32>
    %42 = arith.cmpi eq, %41, %14 : vector<4x50xi32>
    %43 = arith.extui %42 : vector<4x50xi1> to vector<4x50xi32>
    %44 = arith.sitofp %43 : vector<4x50xi32> to vector<4x50xf32>
    %45 = arith.addf %39, %44 : vector<4x50xf32>
    %46 = vector.extract_strided_slice %7 {offsets = [0, 5], sizes = [4, 1], strides = [1, 1]} : vector<4x8xi32> to vector<4x1xi32>
    %47 = vector.broadcast %46 : vector<4x1xi32> to vector<4x50xi32>
    %48 = arith.cmpi eq, %47, %14 : vector<4x50xi32>
    %49 = arith.extui %48 : vector<4x50xi1> to vector<4x50xi32>
    %50 = arith.sitofp %49 : vector<4x50xi32> to vector<4x50xf32>
    %51 = arith.addf %45, %50 : vector<4x50xf32>
    %52 = vector.extract_strided_slice %7 {offsets = [0, 6], sizes = [4, 1], strides = [1, 1]} : vector<4x8xi32> to vector<4x1xi32>
    %53 = vector.broadcast %52 : vector<4x1xi32> to vector<4x50xi32>
    %54 = arith.cmpi eq, %53, %14 : vector<4x50xi32>
    %55 = arith.extui %54 : vector<4x50xi1> to vector<4x50xi32>
    %56 = arith.sitofp %55 : vector<4x50xi32> to vector<4x50xf32>
    %57 = arith.addf %51, %56 : vector<4x50xf32>
    %58 = vector.extract_strided_slice %7 {offsets = [0, 7], sizes = [4, 1], strides = [1, 1]} : vector<4x8xi32> to vector<4x1xi32>
    %59 = vector.broadcast %58 : vector<4x1xi32> to vector<4x50xi32>
    %60 = arith.cmpi eq, %59, %14 : vector<4x50xi32>
    %61 = arith.extui %60 : vector<4x50xi1> to vector<4x50xi32>
    %62 = arith.sitofp %61 : vector<4x50xi32> to vector<4x50xf32>
    %63 = arith.addf %57, %62 : vector<4x50xf32>
    %64 = arith.truncf %63 : vector<4x50xf32> to vector<4x50xbf16>
    %c0_10 = arith.constant 0 : index
    %c0_11 = arith.constant 0 : index
    %c0_12 = arith.constant 0 : index
    %65 = vector.load %arg3[%c0_10, %c0_11, %c0_12] : memref<2x50x32xbf16, #tpu.memory_space<vmem>>, vector<1x50x32xbf16>
    %66 = vector.shape_cast %65 : vector<1x50x32xbf16> to vector<50x32xbf16>
    %cst_13 = arith.constant dense<0.000000e+00> : vector<4x32xf32>
    %67 = tpu.matmul %64, %66, %cst_13 {dimension_numbers = #tpu.dot_dimension_numbers<[1], [0], [0], [1], [0, 0, 1, 1], [], []>} : vector<4x50xbf16>, vector<50x32xbf16>, vector<4x32xf32> -> vector<4x32xf32>
    %c1_14 = arith.constant 1 : index
    %c0_15 = arith.constant 0 : index
    %c0_16 = arith.constant 0 : index
    %68 = vector.load %arg3[%c1_14, %c0_15, %c0_16] : memref<2x50x32xbf16, #tpu.memory_space<vmem>>, vector<1x50x32xbf16>
    %69 = vector.shape_cast %68 : vector<1x50x32xbf16> to vector<50x32xbf16>
    %cst_17 = arith.constant dense<0.000000e+00> : vector<4x32xf32>
    %70 = tpu.matmul %64, %69, %cst_17 {dimension_numbers = #tpu.dot_dimension_numbers<[1], [0], [0], [1], [0, 0, 1, 1], [], []>} : vector<4x50xbf16>, vector<50x32xbf16>, vector<4x32xf32> -> vector<4x32xf32>
    %71 = arith.addf %67, %70 : vector<4x32xf32>
    %cst_18 = arith.constant 1.250000e-01 : f32
    %72 = vector.broadcast %cst_18 : f32 to vector<4x1xf32>
    %73 = arith.mulf %13, %72 : vector<4x1xf32>
    %74 = vector.broadcast %73 : vector<4x1xf32> to vector<4x32xf32>
    %75 = arith.mulf %71, %74 : vector<4x32xf32>
    %76 = arith.truncf %75 : vector<4x32xf32> to vector<4x32xbf16>
    %c0_19 = arith.constant 0 : index
    %c0_20 = arith.constant 0 : index
    %77 = vector.load %arg4[%c0_19, %c0_20] : memref<32x32xbf16, #tpu.memory_space<vmem>>, vector<32x32xbf16>
    %cst_21 = arith.constant dense<0.000000e+00> : vector<4x32xf32>
    %78 = tpu.matmul %76, %77, %cst_21 {dimension_numbers = #tpu.dot_dimension_numbers<[1], [0], [0], [1], [0, 0, 1, 1], [], []>} : vector<4x32xbf16>, vector<32x32xbf16>, vector<4x32xf32> -> vector<4x32xf32>
    %79 = vector.broadcast %0 : vector<1x32xf32> to vector<4x32xf32>
    %80 = arith.addf %78, %79 : vector<4x32xf32>
    %cst_22 = arith.constant 2.000000e-01 : f32
    %81 = vector.broadcast %cst_22 : f32 to vector<4x32xf32>
    %82 = arith.mulf %81, %80 : vector<4x32xf32>
    %83 = arith.maximumf %80, %82 : vector<4x32xf32>
    %84 = arith.truncf %83 : vector<4x32xf32> to vector<4x32xbf16>
    %c0_23 = arith.constant 0 : index
    %c0_24 = arith.constant 0 : index
    %85 = vector.load %arg5[%c0_23, %c0_24] : memref<32x32xbf16, #tpu.memory_space<vmem>>, vector<32x32xbf16>
    %cst_25 = arith.constant dense<0.000000e+00> : vector<4x32xf32>
    %86 = tpu.matmul %84, %85, %cst_25 {dimension_numbers = #tpu.dot_dimension_numbers<[1], [0], [0], [1], [0, 0, 1, 1], [], []>} : vector<4x32xbf16>, vector<32x32xbf16>, vector<4x32xf32> -> vector<4x32xf32>
    %87 = vector.broadcast %1 : vector<1x32xf32> to vector<4x32xf32>
    %88 = arith.addf %86, %87 : vector<4x32xf32>
    %cst_26 = arith.constant 2.000000e-01 : f32
    %89 = vector.broadcast %cst_26 : f32 to vector<4x32xf32>
    %90 = arith.mulf %89, %88 : vector<4x32xf32>
    %91 = arith.maximumf %88, %90 : vector<4x32xf32>
    %92 = arith.truncf %91 : vector<4x32xf32> to vector<4x32xbf16>
    %c0_27 = arith.constant 0 : index
    %c0_28 = arith.constant 0 : index
    %93 = vector.load %arg6[%c0_27, %c0_28] : memref<32x32xbf16, #tpu.memory_space<vmem>>, vector<32x32xbf16>
    %cst_29 = arith.constant dense<0.000000e+00> : vector<4x32xf32>
    %94 = tpu.matmul %92, %93, %cst_29 {dimension_numbers = #tpu.dot_dimension_numbers<[1], [0], [0], [1], [0, 0, 1, 1], [], []>} : vector<4x32xbf16>, vector<32x32xbf16>, vector<4x32xf32> -> vector<4x32xf32>
    %95 = vector.broadcast %2 : vector<1x32xf32> to vector<4x32xf32>
    %96 = arith.addf %94, %95 : vector<4x32xf32>
    %97 = vector.extract_strided_slice %96 {offsets = [0, 0], sizes = [2, 32], strides = [1, 1]} : vector<4x32xf32> to vector<2x32xf32>
    %98 = vector.extract_strided_slice %96 {offsets = [2, 0], sizes = [2, 32], strides = [1, 1]} : vector<4x32xf32> to vector<2x32xf32>
    %99 = arith.truncf %98 : vector<2x32xf32> to vector<2x32xbf16>
    %c0_30 = arith.constant 0 : index
    %c0_31 = arith.constant 0 : index
    %100 = vector.load %arg7[%c0_30, %c0_31] : memref<32x32xbf16, #tpu.memory_space<vmem>>, vector<32x32xbf16>
    %cst_32 = arith.constant dense<0.000000e+00> : vector<2x32xf32>
    %101 = tpu.matmul %99, %100, %cst_32 {dimension_numbers = #tpu.dot_dimension_numbers<[1], [0], [0], [1], [0, 0, 1, 1], [], []>} : vector<2x32xbf16>, vector<32x32xbf16>, vector<2x32xf32> -> vector<2x32xf32>
    %102 = vector.broadcast %3 : vector<1x32xf32> to vector<2x32xf32>
    %103 = arith.addf %101, %102 : vector<2x32xf32>
    %cst_33 = arith.constant 2.000000e-01 : f32
    %104 = vector.broadcast %cst_33 : f32 to vector<2x32xf32>
    %105 = arith.mulf %104, %103 : vector<2x32xf32>
    %106 = arith.maximumf %103, %105 : vector<2x32xf32>
    %107 = arith.subf %97, %106 : vector<2x32xf32>
    %108 = math.absf %107 : vector<2x32xf32>
    %109 = arith.mulf %97, %106 : vector<2x32xf32>
    %110 = tpu.concatenate %97, %106, %108, %109 in 1 : vector<2x32xf32>, vector<2x32xf32>, vector<2x32xf32>, vector<2x32xf32> -> vector<2x128xf32>
    %111 = arith.truncf %110 : vector<2x128xf32> to vector<2x128xbf16>
    %c0_34 = arith.constant 0 : index
    %c0_35 = arith.constant 0 : index
    %112 = vector.load %arg8[%c0_34, %c0_35] : memref<128x2xbf16, #tpu.memory_space<vmem>>, vector<128x2xbf16>
    %cst_36 = arith.constant dense<0.000000e+00> : vector<2x2xf32>
    %113 = tpu.matmul %111, %112, %cst_36 {dimension_numbers = #tpu.dot_dimension_numbers<[1], [0], [0], [1], [0, 0, 1, 1], [], []>} : vector<2x128xbf16>, vector<128x2xbf16>, vector<2x2xf32> -> vector<2x2xf32>
    %114 = vector.broadcast %4 : vector<1x2xf32> to vector<2x2xf32>
    %115 = arith.addf %113, %114 : vector<2x2xf32>
    %c0_37 = arith.constant 0 : index
    %c0_38 = arith.constant 0 : index
    %116 = vector.load %arg10[%c0_37, %c0_38] : memref<2x2xf32, #tpu.memory_space<vmem>>, vector<2x2xf32>
    tpu.vector_store %arg10[%c0_37, %c0_38], %115 {strides = array<i32>} : memref<2x2xf32, #tpu.memory_space<vmem>>, vector<2x2xf32>,
    return
  }
  func.func @transform_0(%arg0: i32) -> (i32, i32) {
    %c0_i32 = arith.constant 0 : i32
    %c0_i32_0 = arith.constant 0 : i32
    return %arg0, %c0_i32 : i32, i32
  }
  func.func @transform_1(%arg0: i32) -> (i32, i32) {
    %c0_i32 = arith.constant 0 : i32
    %c0_i32_0 = arith.constant 0 : i32
    return %arg0, %c0_i32 : i32, i32
  }
  func.func @transform_2(%arg0: i32) -> (i32, i32, i32) {
    %c0_i32 = arith.constant 0 : i32
    %c0_i32_0 = arith.constant 0 : i32
    %c0_i32_1 = arith.constant 0 : i32
    %c0_i32_2 = arith.constant 0 : i32
    return %c0_i32, %c0_i32_0, %c0_i32_1 : i32, i32, i32
  }
  func.func @transform_3(%arg0: i32) -> (i32, i32) {
    %c0_i32 = arith.constant 0 : i32
    %c0_i32_0 = arith.constant 0 : i32
    %c0_i32_1 = arith.constant 0 : i32
    return %c0_i32, %c0_i32_0 : i32, i32
  }
  func.func @transform_4(%arg0: i32) -> (i32, i32) {
    %c0_i32 = arith.constant 0 : i32
    %c0_i32_0 = arith.constant 0 : i32
    %c0_i32_1 = arith.constant 0 : i32
    return %c0_i32, %c0_i32_0 : i32, i32
  }
  func.func @transform_5(%arg0: i32) -> (i32, i32) {
    %c0_i32 = arith.constant 0 : i32
    %c0_i32_0 = arith.constant 0 : i32
    %c0_i32_1 = arith.constant 0 : i32
    return %c0_i32, %c0_i32_0 : i32, i32
  }
  func.func @transform_6(%arg0: i32) -> (i32, i32) {
    %c0_i32 = arith.constant 0 : i32
    %c0_i32_0 = arith.constant 0 : i32
    %c0_i32_1 = arith.constant 0 : i32
    return %c0_i32, %c0_i32_0 : i32, i32
  }
  func.func @transform_7(%arg0: i32) -> (i32, i32) {
    %c0_i32 = arith.constant 0 : i32
    %c0_i32_0 = arith.constant 0 : i32
    %c0_i32_1 = arith.constant 0 : i32
    return %c0_i32, %c0_i32_0 : i32, i32
  }
  func.func @transform_8(%arg0: i32) -> (i32, i32) {
    %c0_i32 = arith.constant 0 : i32
    %c0_i32_0 = arith.constant 0 : i32
    %c0_i32_1 = arith.constant 0 : i32
    return %c0_i32, %c0_i32_0 : i32, i32
  }
  func.func @transform_9(%arg0: i32) -> (i32, i32) {
    %c0_i32 = arith.constant 0 : i32
    %c0_i32_0 = arith.constant 0 : i32
    return %arg0, %c0_i32 : i32, i32
  }
}

</mosaic_0001>

<llo_original>
// kernel: tpu_custom_call.1
$region0: #{tpu_custom_call.1}
  #allocation0 [shape = 'u32[]', space=smem, size = 0x4, offset = 0x4, fixed_abs, tag = 'smem constant byte address 0x4 - core index']
  #allocation1 [shape = 'u32[72,128]{1,0:T(1,128)}', space=vmem, size = 0x9000, scoped, tag = 'internal scratch']
  %s0 = inlined_call_operand.vmem [shape: s32[2,8], index: 0, kind: input, shape index: {}]
  %s1 = inlined_call_operand.vmem [shape: s32[2,8], index: 1, kind: input, shape index: {}]
  %s2 = inlined_call_operand.vmem [shape: bf16[2,50,32], index: 2, kind: input, shape index: {}]
  %s3 = inlined_call_operand.vmem [shape: bf16[32,32], index: 3, kind: input, shape index: {}]
  %s4 = inlined_call_operand.vmem [shape: bf16[32,32], index: 4, kind: input, shape index: {}]
  %s5 = inlined_call_operand.vmem [shape: bf16[32,32], index: 5, kind: input, shape index: {}]
  %s6 = inlined_call_operand.vmem [shape: bf16[32,32], index: 6, kind: input, shape index: {}]
  %s7 = inlined_call_operand.vmem [shape: bf16[128,2], index: 7, kind: input, shape index: {}]
  %s8 = inlined_call_operand.vmem [shape: f32[5,32], index: 8, kind: input, shape index: {}]
  %s9 = inlined_call_operand.hbm [shape: f32[2,2], index: 9, kind: output, shape index: {}]
  %s10 = sld [smem:[#allocation0]]
  $region46: #{tpu_custom_call.1} parent=0
    _
  %s12 = ssub.s32 1, %s10
  %s13 = scalar_select 0, %s12, %s10
  $region1: #{tpu_custom_call.1} parent=0
    #allocation2 [shape = 'u8[1024]{0}', space=vmem, size = 0x400, scoped, tag = 'output window, operand 0, single buffered']
    #allocation3 [shape = 's32[1]{0}', space=sflag, size = 0x4, scoped, tag = 'scoped memory for tpu_custom_call.1']
    %14 = vsyncpa [#allocation3], 0
    // Predicated region
    $region2: #{tpu_custom_call.1} parent=1 // pred_check
      _
    $region3: #{tpu_custom_call.1} parent=1 // pred_check_branch
      %16 = sbr.rel (0) target = $region5
    $region4: #{tpu_custom_call.1} parent=1 // pred_region
      _
    $region5: #{tpu_custom_call.1} parent=1 // pred_fallthru
      _
    // Predicated region
    $region6: #{tpu_custom_call.1} parent=1 // pred_check
      _
    $region7: #{tpu_custom_call.1} parent=1 // pred_check_branch
      %18 = sbr.rel (0) target = $region9
    $region8: #{tpu_custom_call.1} parent=1 // pred_region
      _
    $region9: #{tpu_custom_call.1} parent=1 // pred_fallthru
      _
    // Predicated region
    $region10: #{tpu_custom_call.1} parent=1 // pred_check
      _
    $region11: #{tpu_custom_call.1} parent=1 // pred_check_branch
      %20 = sbr.rel (0) target = $region13
    $region12: #{tpu_custom_call.1} parent=1 // pred_region
      _
    $region13: #{tpu_custom_call.1} parent=1 // pred_fallthru
      _
    // Predicated region
    $region14: #{tpu_custom_call.1} parent=1 // pred_check
      _
    $region15: #{tpu_custom_call.1} parent=1 // pred_check_branch
      %22 = sbr.rel (0) target = $region17
    $region16: #{tpu_custom_call.1} parent=1 // pred_region
      _
    $region17: #{tpu_custom_call.1} parent=1 // pred_fallthru
      _
    // Predicated region
    $region18: #{tpu_custom_call.1} parent=1 // pred_check
      _
    $region19: #{tpu_custom_call.1} parent=1 // pred_check_branch
      %24 = sbr.rel (0) target = $region21
    $region20: #{tpu_custom_call.1} parent=1 // pred_region
      _
    $region21: #{tpu_custom_call.1} parent=1 // pred_fallthru
      _
    // Predicated region
    $region22: #{tpu_custom_call.1} parent=1 // pred_check
      _
    $region23: #{tpu_custom_call.1} parent=1 // pred_check_branch
      %26 = sbr.rel (0) target = $region25
    $region24: #{tpu_custom_call.1} parent=1 // pred_region
      _
    $region25: #{tpu_custom_call.1} parent=1 // pred_fallthru
      _
    // Predicated region
    $region26: #{tpu_custom_call.1} parent=1 // pred_check
      _
    $region27: #{tpu_custom_call.1} parent=1 // pred_check_branch
      %28 = sbr.rel (0) target = $region29
    $region28: #{tpu_custom_call.1} parent=1 // pred_region
      _
    $region29: #{tpu_custom_call.1} parent=1 // pred_fallthru
      _
    // Predicated region
    $region30: #{tpu_custom_call.1} parent=1 // pred_check
      _
    $region31: #{tpu_custom_call.1} parent=1 // pred_check_branch
      %30 = sbr.rel (0) target = $region33
    $region32: #{tpu_custom_call.1} parent=1 // pred_region
      _
    $region33: #{tpu_custom_call.1} parent=1 // pred_fallthru
      _
    // Predicated region
    $region34: #{tpu_custom_call.1} parent=1 // pred_check
      _
    $region35: #{tpu_custom_call.1} parent=1 // pred_check_branch
      %32 = sbr.rel (0) target = $region37
    $region36: #{tpu_custom_call.1} parent=1 // pred_region
      _
    $region37: #{tpu_custom_call.1} parent=1 // pred_fallthru
      _
    %v34 = vld [vmem:[%s8] sm:$0x1]
    %v35 = vld [vmem:[%s8 + $0x1] sm:$0x1]
    %v36 = vld [vmem:[%s8 + $0x2] sm:$0x1]
    %v37 = vld [vmem:[%s8 + $0x3] sm:$0x1]
    %v38 = vld [vmem:[%s8 + $0x4] sm:$0x1]
    %v39 = vld [vmem:[%s0] sm:$0x3]
    %v40 = vld [vmem:[%s1] sm:$0x3]
    %v41 = vrot.slane %v40, 6
    %vm42 = vcmask 1041408
    %v43 = vsel %vm42, %v39, %v41
    %vm44 = vcmp.ge.s32.totalorder %v43, 1
    %v45 = vsel %vm44, 1, 0
    %v46 = vcvt.s32.f32 %v45
    %vm47 = vcmask 60416
    %v48 = vsel %vm47, %v46, 0.0
    %49 = vadd.xlane.f32.xlu0 %v48
    %v50 = vpop.xlane.xlu0 %49
    %v51 = vlaneseq
    %v52 = vand.u32 %v51, 127
    %53 = vset.pattern.permute.xlu0 0
    %54 = vperm.xlu0 %53, %v43
    %v55 = vpop.permute.xlu0 %54
    %vm56 = vcmp.eq.s32.totalorder %v55, %v52
    %v57 = vsel %vm56, 1, 0
    %v58 = vcvt.s32.f32 %v57
    %v59 = vadd.f32 %v58, 0.0
    %60 = vset.pattern.permute.xlu0 1
    %61 = vperm.xlu0 %60, %v43
    %v62 = vpop.permute.xlu0 %61
    %vm63 = vcmp.eq.s32.totalorder %v62, %v52
    %v64 = vsel %vm63, 1, 0
    %v65 = vcvt.s32.f32 %v64
    %v66 = vadd.f32 %v59, %v65
    %67 = vset.pattern.permute.xlu0 2
    %68 = vperm.xlu0 %67, %v43
    %v69 = vpop.permute.xlu0 %68
    %vm70 = vcmp.eq.s32.totalorder %v69, %v52
    %v71 = vsel %vm70, 1, 0
    %v72 = vcvt.s32.f32 %v71
    %v73 = vadd.f32 %v66, %v72
    %74 = vset.pattern.permute.xlu0 3
    %75 = vperm.xlu0 %74, %v43
    %v76 = vpop.permute.xlu0 %75
    %vm77 = vcmp.eq.s32.totalorder %v76, %v52
    %v78 = vsel %vm77, 1, 0
    %v79 = vcvt.s32.f32 %v78
    %v80 = vadd.f32 %v73, %v79
    %81 = vset.pattern.permute.xlu0 4
    %82 = vperm.xlu0 %81, %v43
    %v83 = vpop.permute.xlu0 %82
    %vm84 = vcmp.eq.s32.totalorder %v83, %v52
    %v85 = vsel %vm84, 1, 0
    %v86 = vcvt.s32.f32 %v85
    %v87 = vadd.f32 %v80, %v86
    %88 = vset.pattern.permute.xlu0 5
    %89 = vperm.xlu0 %88, %v43
    %v90 = vpop.permute.xlu0 %89
    %vm91 = vcmp.eq.s32.totalorder %v90, %v52
    %v92 = vsel %vm91, 1, 0
    %v93 = vcvt.s32.f32 %v92
    %v94 = vadd.f32 %v87, %v93
    %95 = vset.pattern.permute.xlu0 6
    %96 = vperm.xlu0 %95, %v43
    %v97 = vpop.permute.xlu0 %96
    %vm98 = vcmp.eq.s32.totalorder %v97, %v52
    %v99 = vsel %vm98, 1, 0
    %v100 = vcvt.s32.f32 %v99
    %v101 = vadd.f32 %v94, %v100
    %102 = vset.pattern.permute.xlu0 7
    %103 = vperm.xlu0 %102, %v43
    %v104 = vpop.permute.xlu0 %103
    %vm105 = vcmp.eq.s32.totalorder %v104, %v52
    %v106 = vsel %vm105, 1, 0
    %v107 = vcvt.s32.f32 %v106
    %v108 = vadd.f32 %v101, %v107
    %v109 = vpack.c.bf16 %v108, %v108
    %v110 = vld [vmem:[%s2] sm:$0xf]
    %v111 = vld [vmem:[%s2 + $0x4] sm:$0xf]
    %v112 = vld [vmem:[%s2 + $0x8] sm:$0xf]
    %v113 = vld [vmem:[%s2 + $0xc] sm:$0xf]
    %v114 = vld [vmem:[%s2 + $0x10] sm:$0xf]
    %v115 = vld [vmem:[%s2 + $0x14] sm:$0xf]
    %v116 = vld [vmem:[%s2 + $0x18] sm:$0x1]
    %s117 = scalar_lea.vmem %s2, 28
    %v118 = vld [vmem:[%s117] sm:$0xf]
    %v119 = vld [vmem:[%s117 + $0x4] sm:$0xf]
    %v120 = vld [vmem:[%s117 + $0x8] sm:$0xf]
    %v121 = vld [vmem:[%s117 + $0xc] sm:$0xf]
    %v122 = vld [vmem:[%s117 + $0x10] sm:$0xf]
    %v123 = vld [vmem:[%s117 + $0x14] sm:$0xf]
    %v124 = vld [vmem:[%s117 + $0x18] sm:$0x1]
    %v132 = vunpack.c.l.b16 %v118
    %v133 = vunpack.c.l.b16 %v119
    %v134 = vunpack.c.l.b16 %v120
    %v135 = vunpack.c.l.b16 %v121
    %v136 = vunpack.c.l.b16 %v122
    %v137 = vunpack.c.l.b16 %v123
    %v138 = vunpack.c.l.b16 %v124
    %v139 = vpack.c.b16 %v133, %v132
    %v140 = vpack.c.b16 %v135, %v134
    %v141 = vpack.c.b16 %v137, %v136
    %v142 = vpack.c.b16 %v138, %v138
    %vm146 = vcmask 408576
    %v148 = vsel %vm146, %v109, 0
    %vm150 = vcmask 1040384
    %v152 = vsel %vm150, %v142, 0
    %154 = vmatpush.bf16.msra.mxu0 0
    %155 = vmatpush.bf16.msra.mxu0 0
    %156 = vmatpush.bf16.msra.mxu0 0
    %157 = vmatpush.bf16.msra.mxu0 0
    %158 = vmatpush.bf16.msra.mxu0 %v152
    %159 = vmatpush.bf16.msra.mxu0 %v141
    %160 = vmatpush.bf16.msra.mxu0 %v140
    %161 = vmatpush.bf16.msra.mxu0 %v139
    %162 = vmatmul.bf16.gmra.mxu0 %v148
    %v163 = vpop.f32.mrf.mxu0
    %v164 = vadd.f32 0.0, %v163
    %v165 = vpop.f32.mrf.mxu0
    %166 = vdwg.mxu0
    %v174 = vunpack.c.l.b16 %v110
    %v175 = vunpack.c.l.b16 %v111
    %v176 = vunpack.c.l.b16 %v112
    %v177 = vunpack.c.l.b16 %v113
    %v178 = vunpack.c.l.b16 %v114
    %v179 = vunpack.c.l.b16 %v115
    %v180 = vunpack.c.l.b16 %v116
    %v181 = vpack.c.b16 %v175, %v174
    %v182 = vpack.c.b16 %v177, %v176
    %v183 = vpack.c.b16 %v179, %v178
    %v184 = vpack.c.b16 %v180, %v180
    %v189 = vsel %vm150, %v184, 0
    %191 = vmatpush.bf16.msra.mxu0 0
    %192 = vmatpush.bf16.msra.mxu0 0
    %193 = vmatpush.bf16.msra.mxu0 0
    %194 = vmatpush.bf16.msra.mxu0 0
    %195 = vmatpush.bf16.msra.mxu0 %v189
    %196 = vmatpush.bf16.msra.mxu0 %v183
    %197 = vmatpush.bf16.msra.mxu0 %v182
    %198 = vmatpush.bf16.msra.mxu0 %v181
    %199 = vmatmul.bf16.gmra.mxu0 %v148
    %v200 = vpop.f32.mrf.mxu0
    %v201 = vadd.f32 %v164, %v200
    %v202 = vpop.f32.mrf.mxu0
    %203 = vdwg.mxu0
    %v204 = vmul.f32 %v50, 0.125
    %v205 = vmul.f32 %v201, %v204
    %v206 = vpack.c.bf16 %v205, %v205
    %v207 = vld [vmem:[%s3] sm:$0xf]
    %v208 = vld [vmem:[%s3 + $0x4] sm:$0xf]
    %v209 = vld [vmem:[%s3 + $0x8] sm:$0xf]
    %v210 = vld [vmem:[%s3 + $0xc] sm:$0xf]
    %v211 = vperm.slane %v34, 0
    %v216 = vunpack.c.l.b16 %v207
    %v217 = vunpack.c.l.b16 %v208
    %v218 = vunpack.c.l.b16 %v209
    %v219 = vunpack.c.l.b16 %v210
    %v220 = vpack.c.b16 %v217, %v216
    %v221 = vpack.c.b16 %v219, %v218
    %vm224 = vcmask 261120
    %v226 = vsel %vm224, %v206, 0
    %228 = vmatpush.bf16.msra.mxu0 0
    %229 = vmatpush.bf16.msra.mxu0 0
    %230 = vmatpush.bf16.msra.mxu0 0
    %231 = vmatpush.bf16.msra.mxu0 0
    %232 = vmatpush.bf16.msra.mxu0 0
    %233 = vmatpush.bf16.msra.mxu0 0
    %234 = vmatpush.bf16.msra.mxu0 %v221
    %235 = vmatpush.bf16.msra.mxu0 %v220
    %236 = vmatmul.bf16.gmra.mxu0 %v226
    %v237 = vpop.f32.mrf.mxu0
    %v238 = vadd.f32 %v211, %v237
    %v239 = vpop.f32.mrf.mxu0
    %240 = vdwg.mxu0
    %v241 = vmul.f32 %v238, 0.2
    %v242 = vmax.f32 %v238, %v241
    %v243 = vpack.c.bf16 %v242, %v242
    %v244 = vld [vmem:[%s4] sm:$0xf]
    %v245 = vld [vmem:[%s4 + $0x4] sm:$0xf]
    %v246 = vld [vmem:[%s4 + $0x8] sm:$0xf]
    %v247 = vld [vmem:[%s4 + $0xc] sm:$0xf]
    %v248 = vperm.slane %v35, 0
    %v253 = vunpack.c.l.b16 %v244
    %v254 = vunpack.c.l.b16 %v245
    %v255 = vunpack.c.l.b16 %v246
    %v256 = vunpack.c.l.b16 %v247
    %v257 = vpack.c.b16 %v254, %v253
    %v258 = vpack.c.b16 %v256, %v255
    %v262 = vsel %vm224, %v243, 0
    %264 = vmatpush.bf16.msra.mxu0 0
    %265 = vmatpush.bf16.msra.mxu0 0
    %266 = vmatpush.bf16.msra.mxu0 0
    %267 = vmatpush.bf16.msra.mxu0 0
    %268 = vmatpush.bf16.msra.mxu0 0
    %269 = vmatpush.bf16.msra.mxu0 0
    %270 = vmatpush.bf16.msra.mxu0 %v258
    %271 = vmatpush.bf16.msra.mxu0 %v257
    %272 = vmatmul.bf16.gmra.mxu0 %v262
    %v273 = vpop.f32.mrf.mxu0
    %v274 = vadd.f32 %v248, %v273
    %v275 = vpop.f32.mrf.mxu0
    %276 = vdwg.mxu0
    %v277 = vmul.f32 %v274, 0.2
    %v278 = vmax.f32 %v274, %v277
    %v279 = vpack.c.bf16 %v278, %v278
    %v280 = vld [vmem:[%s5] sm:$0xf]
    %v281 = vld [vmem:[%s5 + $0x4] sm:$0xf]
    %v282 = vld [vmem:[%s5 + $0x8] sm:$0xf]
    %v283 = vld [vmem:[%s5 + $0xc] sm:$0xf]
    %v284 = vperm.slane %v36, 0
    %v289 = vunpack.c.l.b16 %v280
    %v290 = vunpack.c.l.b16 %v281
    %v291 = vunpack.c.l.b16 %v282
    %v292 = vunpack.c.l.b16 %v283
    %v293 = vpack.c.b16 %v290, %v289
    %v294 = vpack.c.b16 %v292, %v291
    %v298 = vsel %vm224, %v279, 0
    %300 = vmatpush.bf16.msra.mxu0 0
    %301 = vmatpush.bf16.msra.mxu0 0
    %302 = vmatpush.bf16.msra.mxu0 0
    %303 = vmatpush.bf16.msra.mxu0 0
    %304 = vmatpush.bf16.msra.mxu0 0
    %305 = vmatpush.bf16.msra.mxu0 0
    %306 = vmatpush.bf16.msra.mxu0 %v294
    %307 = vmatpush.bf16.msra.mxu0 %v293
    %308 = vmatmul.bf16.gmra.mxu0 %v298
    %v309 = vpop.f32.mrf.mxu0
    %v310 = vadd.f32 %v284, %v309
    %v311 = vpop.f32.mrf.mxu0
    %312 = vdwg.mxu0
    %v313 = vpack.c.bf16 %v310, %v310
    %v314 = vld [vmem:[%s6] sm:$0xf]
    %v315 = vld [vmem:[%s6 + $0x4] sm:$0xf]
    %v316 = vld [vmem:[%s6 + $0x8] sm:$0xf]
    %v317 = vld [vmem:[%s6 + $0xc] sm:$0xf]
    %v318 = vperm.slane %v37, 0
    %v320 = vrot.slane %v313, 1
    %v325 = vunpack.c.l.b16 %v314
    %v326 = vunpack.c.l.b16 %v315
    %v327 = vunpack.c.l.b16 %v316
    %v328 = vunpack.c.l.b16 %v317
    %v329 = vpack.c.b16 %v326, %v325
    %v330 = vpack.c.b16 %v328, %v327
    %v334 = vsel %vm224, %v320, 0
    %336 = vmatpush.bf16.msra.mxu0 0
    %337 = vmatpush.bf16.msra.mxu0 0
    %338 = vmatpush.bf16.msra.mxu0 0
    %339 = vmatpush.bf16.msra.mxu0 0
    %340 = vmatpush.bf16.msra.mxu0 0
    %341 = vmatpush.bf16.msra.mxu0 0
    %342 = vmatpush.bf16.msra.mxu0 %v330
    %343 = vmatpush.bf16.msra.mxu0 %v329
    %344 = vmatmul.bf16.gmra.mxu0 %v334
    %v345 = vpop.f32.mrf.mxu0
    %v346 = vadd.f32 %v318, %v345
    %v347 = vpop.f32.mrf.mxu0
    %348 = vdwg.mxu0
    %v349 = vmul.f32 %v346, 0.2
    %v350 = vmax.f32 %v346, %v349
    %v351 = vsub.f32 %v310, %v350
    %v352 = vand.u32 2147483647, %v351
    %v353 = vmul.f32 %v310, %v350
    %355 = vrot.lane.b32.xlu0 %v350, 32
    %v356 = vpop.permute.xlu0 %355
    %359 = vrot.lane.b32.xlu0 %v352, 64
    %v360 = vpop.permute.xlu0 %359
    %363 = vrot.lane.b32.xlu0 %v353, 96
    %v364 = vpop.permute.xlu0 %363
    %v366 = vsel %vm224, %v310, %v356
    %vm367 = vcmask 523264
    %v368 = vsel %vm367, %v366, %v360
    %vm369 = vcmask 785408
    %v370 = vsel %vm369, %v368, %v364
    %v371 = vpack.c.bf16 %v370, %v370
    %v372 = vld [vmem:[%s7] sm:$0xf]
    %v373 = vld [vmem:[%s7 + $0x4] sm:$0xf]
    %v374 = vld [vmem:[%s7 + $0x8] sm:$0xf]
    %v375 = vld [vmem:[%s7 + $0xc] sm:$0xf]
    %v376 = vld [vmem:[%s7 + $0x10] sm:$0xf]
    %v377 = vld [vmem:[%s7 + $0x14] sm:$0xf]
    %v378 = vld [vmem:[%s7 + $0x18] sm:$0xf]
    %v379 = vld [vmem:[%s7 + $0x1c] sm:$0xf]
    %v380 = vld [vmem:[%s7 + $0x20] sm:$0xf]
    %v381 = vld [vmem:[%s7 + $0x24] sm:$0xf]
    %v382 = vld [vmem:[%s7 + $0x28] sm:$0xf]
    %v383 = vld [vmem:[%s7 + $0x2c] sm:$0xf]
    %v384 = vld [vmem:[%s7 + $0x30] sm:$0xf]
    %v385 = vld [vmem:[%s7 + $0x34] sm:$0xf]
    %v386 = vld [vmem:[%s7 + $0x38] sm:$0xf]
    %v387 = vld [vmem:[%s7 + $0x3c] sm:$0xf]
    %v388 = vperm.slane %v38, 0
    %v405 = vunpack.c.l.b16 %v372
    %v406 = vunpack.c.l.b16 %v373
    %v407 = vunpack.c.l.b16 %v374
    %v408 = vunpack.c.l.b16 %v375
    %v409 = vunpack.c.l.b16 %v376
    %v410 = vunpack.c.l.b16 %v377
    %v411 = vunpack.c.l.b16 %v378
    %v412 = vunpack.c.l.b16 %v379
    %v413 = vunpack.c.l.b16 %v380
    %v414 = vunpack.c.l.b16 %v381
    %v415 = vunpack.c.l.b16 %v382
    %v416 = vunpack.c.l.b16 %v383
    %v417 = vunpack.c.l.b16 %v384
    %v418 = vunpack.c.l.b16 %v385
    %v419 = vunpack.c.l.b16 %v386
    %v420 = vunpack.c.l.b16 %v387
    %v421 = vpack.c.b16 %v406, %v405
    %v422 = vpack.c.b16 %v408, %v407
    %v423 = vpack.c.b16 %v410, %v409
    %v424 = vpack.c.b16 %v412, %v411
    %v425 = vpack.c.b16 %v414, %v413
    %v426 = vpack.c.b16 %v416, %v415
    %v427 = vpack.c.b16 %v418, %v417
    %v428 = vpack.c.b16 %v420, %v419
    %437 = vmatpush.bf16.msra.mxu0 %v428
    %438 = vmatpush.bf16.msra.mxu0 %v427
    %439 = vmatpush.bf16.msra.mxu0 %v426
    %440 = vmatpush.bf16.msra.mxu0 %v425
    %441 = vmatpush.bf16.msra.mxu0 %v424
    %442 = vmatpush.bf16.msra.mxu0 %v423
    %443 = vmatpush.bf16.msra.mxu0 %v422
    %444 = vmatpush.bf16.msra.mxu0 %v421
    %445 = vmatmul.bf16.gmra.mxu0 %v371
    %v446 = vpop.f32.mrf.mxu0
    %v447 = vadd.f32 %v388, %v446
    %v448 = vpop.f32.mrf.mxu0
    %449 = vdwg.mxu0
    %vm450 = vcmask 9216
    %451 = vst.msk [vmem:[#allocation2] sm:$0x3] %vm450, %v447
    // Predicated region
    $region38: #{tpu_custom_call.1} parent=1 // pred_check
      _
    $region39: #{tpu_custom_call.1} parent=1 // pred_check_branch
      %453 = sbr.rel (0) target = $region41
    $region40: #{tpu_custom_call.1} parent=1 // pred_region
      %455 = vsyncadd [#allocation3], 0
      %s457 = sshll.u32 [#allocation2], 4
      %s458 = int_to_ptr.vmem [resolvable:$true] %s457
      %s459 = sshll.u32 %s9, 4
      %s460 = int_to_ptr.hbm [resolvable:$true] %s459
      %462 = dma.vmem_to_hbm [thread:$0]  %s458, 32, %s460, [#allocation3]
    $region41: #{tpu_custom_call.1} parent=1 // pred_fallthru
      _
    // Predicated region
    $region42: #{tpu_custom_call.1} parent=1 // pred_check
      _
    $region43: #{tpu_custom_call.1} parent=1 // pred_check_branch
      %464 = sbr.rel (0) target = $region45
    $region44: #{tpu_custom_call.1} parent=1 // pred_region
      %466 = dma.done [#allocation3], 32
    $region45: #{tpu_custom_call.1} parent=1 // pred_fallthru
      _
    %467 = vsyncpa [#allocation3], 1

</llo_original>
